<compile_context>
chip_gen: v6e
topology: v6e:2x2x1
jax: 0.10.0
libtpu: 0.0.40
codegen_flags: <defaults>
</compile_context>

<pallas_src>
import jax
import jax.numpy as jnp
from jax.experimental import pallas as pl
from jax.experimental.pallas import tpu as pltpu

_SUB = 8     # sublanes per vreg
_LANE = 128  # lanes per vreg


def _loss_weighted_kernel(pred_ref, label_ref, w_ref, out_ref, acc_ref):
    """Grid = (batch groups, lane tiles).

    Accumulates sum over (TB, C) of w * (pred - label)^2 elementwise into an
    (8, T) f32 VMEM accumulator (pure VPU work), then reduces to a scalar
    partial sum (one XLU reduce per batch group) on the last lane tile.
    """
    t = pl.program_id(1)

    @pl.when(t == 0)
    def _():
        acc_ref[...] = jnp.zeros_like(acc_ref)

    diff = pred_ref[...].astype(jnp.float32) - label_ref[...].astype(jnp.float32)
    w = w_ref[...].astype(jnp.float32)                       # (TB, 1, 8, T)
    # Leading-axis reduction = elementwise vreg adds (VPU); keeps acc at (8, T).
    acc_ref[...] += jnp.sum(w * (diff * diff), axis=(0, 1))  # (8, T)

    @pl.when(t == pl.num_programs(1) - 1)
    def _():
        # One cross-lane/sublane reduce per batch group (XLU), not per grid step.
        out_ref[0, 0] = jnp.sum(acc_ref[...])


def _pick_tiling(B, C, lanes, itemsize, target_bytes=2 << 20):
    """Returns (TB, T, n_batch_groups, n_lane_tiles). `lanes` is a multiple of 128."""
    row_bytes = C * _SUB * lanes * itemsize  # one batch, full lane extent, one input
    if row_bytes <= target_bytes:
        # Whole spatial extent in one tile; amortize per-step overhead by
        # blocking several batches per grid step.
        tb = 1
        for d in range(1, B + 1):
            if B % d == 0 and d * row_bytes <= target_bytes:
                tb = d
        return tb, lanes, B // tb, 1
    # One batch per step; chunk the lane axis into multiple-of-128 tiles.
    max_t = max(_LANE, target_bytes // (C * _SUB * itemsize))
    best = _LANE
    t = _LANE
    while t <= max_t:
        if lanes % t == 0:
            best = t
        t += _LANE
    return 1, best, B, lanes // best


def loss_weighted_on_dict(pred, label, opt_flow, loss_weight=1.0):
    """pred/label: [B, C, H, W]; opt_flow (weight map): [B, H, W]. Returns f32 scalar."""
    B, C, H, W = pred.shape
    assert label.shape == (B, C, H, W)
    assert opt_flow.shape == (B, H, W)

    HW = H * W
    total = B * C * HW

    # Flatten spatial dims (free reshape), then zero-pad H*W to a multiple of 8*128
    # so the (sublane, lane) tiles are fully dense.  Padded weight is zero, so the
    # padded elements contribute nothing to the weighted sum.
    quantum = _SUB * _LANE
    hw_pad = ((HW + quantum - 1) // quantum) * quantum
    pred2 = pred.reshape(B, C, HW)
    label2 = label.reshape(B, C, HW)
    w2 = opt_flow.reshape(B, 1, HW)
    if hw_pad != HW:
        padding = ((0, 0), (0, 0), (0, hw_pad - HW))
        pred2 = jnp.pad(pred2, padding)
        label2 = jnp.pad(label2, padding)
        w2 = jnp.pad(w2, padding)   # zero weight on the tail

    lanes = hw_pad // _SUB
    pred4 = pred2.reshape(B, C, _SUB, lanes)
    label4 = label2.reshape(B, C, _SUB, lanes)
    w4 = w2.reshape(B, 1, _SUB, lanes)

    itemsize = jnp.dtype(pred.dtype).itemsize
    w_itemsize = jnp.dtype(opt_flow.dtype).itemsize
    tb, tile, n_bg, n_t = _pick_tiling(B, C, lanes, max(itemsize, w_itemsize))

    # Explicit VMEM budget: 2 inputs x 2 pipeline buffers + weight buffers + accumulator.
    blk_in = tb * C * _SUB * tile * itemsize
    blk_w = tb * _SUB * tile * w_itemsize
    acc_bytes = _SUB * tile * 4
    need = 4 * blk_in + 2 * blk_w + acc_bytes + (2 << 20)  # + headroom
    vmem_limit = int(min(max(need, 8 << 20), 32 << 20))    # safe on v5e/v6e/v7x

    partials = pl.pallas_call(
        _loss_weighted_kernel,
        out_shape=jax.ShapeDtypeStruct((n_bg, 1), jnp.float32),
        grid_spec=pltpu.PrefetchScalarGridSpec(
            num_scalar_prefetch=0,
            grid=(n_bg, n_t),
            in_specs=[
                pl.BlockSpec((tb, C, _SUB, tile), lambda b, t: (b, 0, 0, t)),
                pl.BlockSpec((tb, C, _SUB, tile), lambda b, t: (b, 0, 0, t)),
                pl.BlockSpec((tb, 1, _SUB, tile), lambda b, t: (b, 0, 0, t)),
            ],
            out_specs=pl.BlockSpec(
                (1, 1), lambda b, t: (b, 0), memory_space=pltpu.MemorySpace.SMEM
            ),
            scratch_shapes=[pltpu.VMEM((_SUB, tile), jnp.float32)],
        ),
        compiler_params=pltpu.CompilerParams(
            dimension_semantics=("parallel", "arbitrary"),
            vmem_limit_bytes=vmem_limit,
        ),
        cost_estimate=pl.CostEstimate(
            flops=4 * total,  # sub, mul, mul, add per element
            transcendentals=0,
            bytes_accessed=(2 * total + B * HW) * itemsize + n_bg * 4,
        ),
    )(pred4, label4, w4)

    # Mean over all B*C*H*W (original, unpadded) elements, then loss_weight scale.
    # loss_weight may be a traced JAX scalar (e.g. a schedule); keep it on-device.
    lw = jnp.asarray(loss_weight, jnp.float32)
    return lw * (jnp.sum(partials) / jnp.float32(total))


def _reference(pred, label, opt_flow, loss_weight=1.0):
    loss = (pred - label) ** 2
    loss = opt_flow[:, None, :, :] * loss
    return loss_weight * jnp.mean(loss)


if __name__ == "__main__":
    B, C, H, W = 2, 4, 16, 16
    key = jax.random.PRNGKey(0)
    k1, k2, k3 = jax.random.split(key, 3)

    pred = jax.random.normal(k1, (B, C, H, W), dtype=jnp.float32)
    label = jax.random.normal(k2, (B, C, H, W), dtype=jnp.float32)
    opt_flow = jax.random.uniform(k3, (B, H, W), dtype=jnp.float32)
    loss_weight = 0.5

    result = loss_weighted_on_dict(pred, label, opt_flow, loss_weight)
    result = jax.block_until_ready(result)

    ref = _reference(pred, label, opt_flow, loss_weight)
    assert jnp.allclose(result, ref, rtol=1e-5, atol=1e-6), (result, ref)

    print("KERNEL_OK")
</pallas_src>

<mosaic_0001>
module attributes {stable_mosaic.version = 11 : i64} {
  func.func @_loss_weighted_kernel(%arg0: i32, %arg1: i32, %arg2: memref<2x4x8x128xf32, #tpu.memory_space<vmem>>, %arg3: memref<2x4x8x128xf32, #tpu.memory_space<vmem>>, %arg4: memref<2x1x8x128xf32, #tpu.memory_space<vmem>>, %arg5: memref<1x1xf32, #tpu.memory_space<smem>>, %arg6: memref<8x128xf32, #tpu.memory_space<vmem>>) attributes {dimension_semantics = [#tpu.dimension_semantics<parallel>, #tpu.dimension_semantics<arbitrary>], iteration_bounds = array<i64: 1, 1>, scalar_prefetch = 0 : i64, scratch_operands = 1 : i64, tpu.core_type = #tpu.core_type<tc>, window_params = [{transform_indices = @transform_0, window_bounds = array<i64: 2, 4, 8, 128>}, {transform_indices = @transform_1, window_bounds = array<i64: 2, 4, 8, 128>}, {transform_indices = @transform_2, window_bounds = array<i64: 2, 1, 8, 128>}, {transform_indices = @transform_3, window_bounds = array<i64: 1, 1>}]} {
    %c0_i32 = arith.constant 0 : i32
    %0 = arith.cmpi eq, %arg1, %c0_i32 : i32
    %1 = arith.extui %0 : i1 to i32
    %c0_i32_0 = arith.constant 0 : i32
    %2 = arith.cmpi ne, %1, %c0_i32_0 : i32
    scf.if %2 {
      %cst_18 = arith.constant 0.000000e+00 : f32
      %17 = vector.broadcast %cst_18 : f32 to vector<8x128xf32>
      %c0_19 = arith.constant 0 : index
      %c0_20 = arith.constant 0 : index
      %18 = vector.load %arg6[%c0_19, %c0_20] : memref<8x128xf32, #tpu.memory_space<vmem>>, vector<8x128xf32>
      tpu.vector_store %arg6[%c0_19, %c0_20], %17 {strides = array<i32>} : memref<8x128xf32, #tpu.memory_space<vmem>>, vector<8x128xf32>,
    } else {
    }
    %c0 = arith.constant 0 : index
    %c0_1 = arith.constant 0 : index
    %c0_2 = arith.constant 0 : index
    %c0_3 = arith.constant 0 : index
    %3 = vector.load %arg2[%c0, %c0_1, %c0_2, %c0_3] : memref<2x4x8x128xf32, #tpu.memory_space<vmem>>, vector<2x4x8x128xf32>
    %c0_4 = arith.constant 0 : index
    %c0_5 = arith.constant 0 : index
    %c0_6 = arith.constant 0 : index
    %c0_7 = arith.constant 0 : index
    %4 = vector.load %arg3[%c0_4, %c0_5, %c0_6, %c0_7] : memref<2x4x8x128xf32, #tpu.memory_space<vmem>>, vector<2x4x8x128xf32>
    %5 = arith.subf %3, %4 : vector<2x4x8x128xf32>
    %c0_8 = arith.constant 0 : index
    %c0_9 = arith.constant 0 : index
    %c0_10 = arith.constant 0 : index
    %c0_11 = arith.constant 0 : index
    %6 = vector.load %arg4[%c0_8, %c0_9, %c0_10, %c0_11] : memref<2x1x8x128xf32, #tpu.memory_space<vmem>>, vector<2x1x8x128xf32>
    %c0_12 = arith.constant 0 : index
    %c0_13 = arith.constant 0 : index
    %7 = vector.load %arg6[%c0_12, %c0_13] : memref<8x128xf32, #tpu.memory_space<vmem>>, vector<8x128xf32>
    %8 = arith.mulf %5, %5 : vector<2x4x8x128xf32>
    %9 = vector.broadcast %6 : vector<2x1x8x128xf32> to vector<2x4x8x128xf32>
    %10 = arith.mulf %9, %8 : vector<2x4x8x128xf32>
    %cst = arith.constant dense<0.000000e+00> : vector<8x128xf32>
    %11 = vector.multi_reduction <add>, %10, %cst [0, 1] : vector<2x4x8x128xf32> to vector<8x128xf32>
    %12 = arith.addf %7, %11 : vector<8x128xf32>
    %c0_14 = arith.constant 0 : index
    %c0_15 = arith.constant 0 : index
    %13 = vector.load %arg6[%c0_14, %c0_15] : memref<8x128xf32, #tpu.memory_space<vmem>>, vector<8x128xf32>
    tpu.vector_store %arg6[%c0_14, %c0_15], %12 {strides = array<i32>} : memref<8x128xf32, #tpu.memory_space<vmem>>, vector<8x128xf32>,
    %c0_i32_16 = arith.constant 0 : i32
    %14 = arith.cmpi eq, %arg1, %c0_i32_16 : i32
    %15 = arith.extui %14 : i1 to i32
    %c0_i32_17 = arith.constant 0 : i32
    %16 = arith.cmpi ne, %15, %c0_i32_17 : i32
    scf.if %16 {
      %c0_18 = arith.constant 0 : index
      %c0_19 = arith.constant 0 : index
      %17 = vector.load %arg6[%c0_18, %c0_19] : memref<8x128xf32, #tpu.memory_space<vmem>>, vector<8x128xf32>
      %18 = vector.shape_cast %17 : vector<8x128xf32> to vector<1x8x128xf32>
      %cst_20 = arith.constant dense<0.000000e+00> : vector<1xf32>
      %19 = vector.multi_reduction <add>, %18, %cst_20 [1, 2] : vector<1x8x128xf32> to vector<1xf32>
      %20 = vector.shape_cast %19 : vector<1xf32> to vector<1x1x1xf32>
      %21 = vector.extract %20[0, 0, 0] : f32 from vector<1x1x1xf32>
      %c0_21 = arith.constant 0 : index
      %c0_22 = arith.constant 0 : index
      %22 = memref.load %arg5[%c0_21, %c0_22] : memref<1x1xf32, #tpu.memory_space<smem>>
      memref.store %21, %arg5[%c0_21, %c0_22] : memref<1x1xf32, #tpu.memory_space<smem>>
    } else {
    }
    return
  }
  func.func @transform_0(%arg0: i32, %arg1: i32) -> (i32, i32, i32, i32) {
    %c0_i32 = arith.constant 0 : i32
    %c0_i32_0 = arith.constant 0 : i32
    %c0_i32_1 = arith.constant 0 : i32
    return %arg0, %c0_i32, %c0_i32_0, %arg1 : i32, i32, i32, i32
  }
  func.func @transform_1(%arg0: i32, %arg1: i32) -> (i32, i32, i32, i32) {
    %c0_i32 = arith.constant 0 : i32
    %c0_i32_0 = arith.constant 0 : i32
    %c0_i32_1 = arith.constant 0 : i32
    return %arg0, %c0_i32, %c0_i32_0, %arg1 : i32, i32, i32, i32
  }
  func.func @transform_2(%arg0: i32, %arg1: i32) -> (i32, i32, i32, i32) {
    %c0_i32 = arith.constant 0 : i32
    %c0_i32_0 = arith.constant 0 : i32
    %c0_i32_1 = arith.constant 0 : i32
    return %arg0, %c0_i32, %c0_i32_0, %arg1 : i32, i32, i32, i32
  }
  func.func @transform_3(%arg0: i32, %arg1: i32) -> (i32, i32) {
    %c0_i32 = arith.constant 0 : i32
    %c0_i32_0 = arith.constant 0 : i32
    return %arg0, %c0_i32 : i32, i32
  }
}

</mosaic_0001>

<llo_original>
// kernel: tpu_custom_call.1
$region0: #{tpu_custom_call.1}
  #allocation0 [shape = 'u32[]', space=smem, size = 0x4, offset = 0x4, fixed_abs, tag = 'smem constant byte address 0x4 - core index']
  #allocation1 [shape = 'u32[144,128]{1,0:T(1,128)}', space=vmem, size = 0x12000, scoped, tag = 'internal scratch']
  #allocation2 [shape = 'f32[8,128]{1,0:T(8,128)}', space=vmem, size = 0x1000, scoped, tag = 'scratch operand']
  %s0 = inlined_call_operand.hbm [shape: f32[2,4,8,128], index: 0, kind: input, shape index: {}]
  %s1 = inlined_call_operand.hbm [shape: f32[2,4,8,128], index: 1, kind: input, shape index: {}]
  %s2 = inlined_call_operand.hbm [shape: f32[2,1,8,128], index: 2, kind: input, shape index: {}]
  %s3 = inlined_call_operand.hbm [shape: f32[1,1], index: 3, kind: output, shape index: {}]
  %s4 = sld [smem:[#allocation0]]
  $region42: #{tpu_custom_call.1} parent=0
    _
  %s6 = ssub.s32 1, %s4
  %s7 = scalar_select 0, %s6, %s4
  $region1: #{tpu_custom_call.1} parent=0
    #allocation3 [shape = 'u8[32768]{0}', space=vmem, size = 0x8000, scoped, tag = 'input window, operand 0, single buffered']
    #allocation4 [shape = 's32[1]{0}', space=sflag, size = 0x4, scoped, tag = 'scoped memory for tpu_custom_call.1']
    #allocation5 [shape = 's32[1]{0}', space=sflag, size = 0x4, scoped, tag = 'scoped memory for tpu_custom_call.1']
    #allocation6 [shape = 'u8[32768]{0}', space=vmem, size = 0x8000, scoped, tag = 'input window, operand 1, single buffered']
    #allocation7 [shape = 's32[1]{0}', space=sflag, size = 0x4, scoped, tag = 'scoped memory for tpu_custom_call.1']
    #allocation8 [shape = 'u8[8192]{0}', space=vmem, size = 0x2000, scoped, tag = 'input window, operand 2, single buffered']
    #allocation9 [shape = 'u8[512]{0}', space=smem, size = 0x200, scoped, tag = 'output window, operand 0, single buffered']
    %8 = vsyncpa [#allocation4], 0
    %9 = vsyncpa [#allocation7], 0
    %10 = vsyncpa [#allocation5], 0
    // Predicated region
    $region2: #{tpu_custom_call.1} parent=1 // pred_check
      _
    $region3: #{tpu_custom_call.1} parent=1 // pred_check_branch
      %12 = sbr.rel (0) target = $region5
    $region4: #{tpu_custom_call.1} parent=1 // pred_region
      %s14 = ssub.s32 1024, 1024
      %15 = vsyncadd [#allocation4], %s14
      %s16 = sshll.u32 [#allocation3], 4
      %s17 = int_to_ptr.vmem [resolvable:$true] %s16
      %22 = dma.hbm_to_vmem [thread:$0]  %s0, 1024, %s17, [#allocation4], 128, 128, 8
    $region5: #{tpu_custom_call.1} parent=1 // pred_fallthru
      _
    // Predicated region
    $region6: #{tpu_custom_call.1} parent=1 // pred_check
      _
    $region7: #{tpu_custom_call.1} parent=1 // pred_check_branch
      %24 = sbr.rel (0) target = $region9
    $region8: #{tpu_custom_call.1} parent=1 // pred_region
      %s26 = ssub.s32 1024, 1024
      %27 = vsyncadd [#allocation7], %s26
      %s28 = sshll.u32 [#allocation6], 4
      %s29 = int_to_ptr.vmem [resolvable:$true] %s28
      %34 = dma.hbm_to_vmem [thread:$0]  %s1, 1024, %s29, [#allocation7], 128, 128, 8
    $region9: #{tpu_custom_call.1} parent=1 // pred_fallthru
      _
    // Predicated region
    $region10: #{tpu_custom_call.1} parent=1 // pred_check
      _
    $region11: #{tpu_custom_call.1} parent=1 // pred_check_branch
      %36 = sbr.rel (0) target = $region13
    $region12: #{tpu_custom_call.1} parent=1 // pred_region
      %s38 = ssub.s32 256, 256
      %39 = vsyncadd [#allocation7], %s38
      %s40 = sshll.u32 [#allocation8], 4
      %s41 = int_to_ptr.vmem [resolvable:$true] %s40
      %46 = dma.hbm_to_vmem [thread:$0]  %s2, 256, %s41, [#allocation7], 128, 128, 8
    $region13: #{tpu_custom_call.1} parent=1 // pred_fallthru
      _
    // Predicated region
    $region14: #{tpu_custom_call.1} parent=1 // pred_check
      _
    $region15: #{tpu_custom_call.1} parent=1 // pred_check_branch
      %48 = sbr.rel (0) target = $region17
    $region16: #{tpu_custom_call.1} parent=1 // pred_region
      %49 = dma.done [#allocation4], 1024
    $region17: #{tpu_custom_call.1} parent=1 // pred_fallthru
      _
    // Predicated region
    $region18: #{tpu_custom_call.1} parent=1 // pred_check
      _
    $region19: #{tpu_custom_call.1} parent=1 // pred_check_branch
      %51 = sbr.rel (0) target = $region21
    $region20: #{tpu_custom_call.1} parent=1 // pred_region
      %52 = dma.done [#allocation7], 1024
    $region21: #{tpu_custom_call.1} parent=1 // pred_fallthru
      _
    // Predicated region
    $region22: #{tpu_custom_call.1} parent=1 // pred_check
      _
    $region23: #{tpu_custom_call.1} parent=1 // pred_check_branch
      %54 = sbr.rel (0) target = $region25
    $region24: #{tpu_custom_call.1} parent=1 // pred_region
      %55 = dma.done [#allocation7], 256
    $region25: #{tpu_custom_call.1} parent=1 // pred_fallthru
      _
    %p56 = scmp.eq.s32.totalorder 0, 0
    // Predicated region
    $region26: #{tpu_custom_call.1} parent=1 // pred_check
      %p57 = pneg %p56
    $region27: #{tpu_custom_call.1} parent=1 // pred_check_branch
      %59 = sbr.rel (%p57) target = $region29
    $region28: #{tpu_custom_call.1} parent=1 // pred_region
      %60 = vst [vmem:[#allocation2] sm:$0xff] 0.0
    $region29: #{tpu_custom_call.1} parent=1 // pred_fallthru
      _
    %v61 = vld [vmem:[#allocation3] sm:$0xff]
    %v62 = vld [vmem:[#allocation3 + $0x8] sm:$0xff]
    %v63 = vld [vmem:[#allocation3 + $0x10] sm:$0xff]
    %v64 = vld [vmem:[#allocation3 + $0x18] sm:$0xff]
    %v65 = vld [vmem:[#allocation3 + $0x20] sm:$0xff]
    %v66 = vld [vmem:[#allocation3 + $0x28] sm:$0xff]
    %v67 = vld [vmem:[#allocation3 + $0x30] sm:$0xff]
    %v68 = vld [vmem:[#allocation3 + $0x38] sm:$0xff]
    %v69 = vld [vmem:[#allocation6] sm:$0xff]
    %v70 = vld [vmem:[#allocation6 + $0x8] sm:$0xff]
    %v71 = vld [vmem:[#allocation6 + $0x10] sm:$0xff]
    %v72 = vld [vmem:[#allocation6 + $0x18] sm:$0xff]
    %v73 = vld [vmem:[#allocation6 + $0x20] sm:$0xff]
    %v74 = vld [vmem:[#allocation6 + $0x28] sm:$0xff]
    %v75 = vld [vmem:[#allocation6 + $0x30] sm:$0xff]
    %v76 = vld [vmem:[#allocation6 + $0x38] sm:$0xff]
    %v77 = vsub.f32 %v61, %v69
    %v78 = vsub.f32 %v62, %v70
    %v79 = vsub.f32 %v63, %v71
    %v80 = vsub.f32 %v64, %v72
    %v81 = vsub.f32 %v65, %v73
    %v82 = vsub.f32 %v66, %v74
    %v83 = vsub.f32 %v67, %v75
    %v84 = vsub.f32 %v68, %v76
    %v85 = vld [vmem:[#allocation8] sm:$0xff]
    %v86 = vld [vmem:[#allocation8 + $0x8] sm:$0xff]
    %v87 = vld [vmem:[#allocation2] sm:$0xff]
    %v88 = vmul.f32 %v77, %v77
    %v89 = vmul.f32 %v78, %v78
    %v90 = vmul.f32 %v79, %v79
    %v91 = vmul.f32 %v80, %v80
    %v92 = vmul.f32 %v81, %v81
    %v93 = vmul.f32 %v82, %v82
    %v94 = vmul.f32 %v83, %v83
    %v95 = vmul.f32 %v84, %v84
    %v96 = vmul.f32 %v85, %v88
    %v97 = vmul.f32 %v85, %v89
    %v98 = vmul.f32 %v85, %v90
    %v99 = vmul.f32 %v85, %v91
    %v100 = vmul.f32 %v86, %v92
    %v101 = vmul.f32 %v86, %v93
    %v102 = vmul.f32 %v86, %v94
    %v103 = vmul.f32 %v86, %v95
    %v104 = vadd.f32 %v96, %v97
    %v105 = vadd.f32 %v104, %v98
    %v106 = vadd.f32 %v105, %v99
    %v107 = vadd.f32 %v106, %v100
    %v108 = vadd.f32 %v107, %v101
    %v109 = vadd.f32 %v108, %v102
    %v110 = vadd.f32 %v109, %v103
    %v111 = vadd.f32 %v87, %v110
    %112 = vst [vmem:[#allocation2] sm:$0xff] %v111
    // Predicated region
    $region30: #{tpu_custom_call.1} parent=1 // pred_check
      %p113 = pneg %p56
    $region31: #{tpu_custom_call.1} parent=1 // pred_check_branch
      %115 = sbr.rel (%p113) target = $region33
    $region32: #{tpu_custom_call.1} parent=1 // pred_region
      %v116 = vld [vmem:[#allocation2] sm:$0xff]
      %117 = vadd.xlane.f32.xlu0 %v116
      %v118 = vpop.xlane.xlu0 %117
      %v119 = vrot.slane %v118, 4
      %v120 = vadd.f32 %v118, %v119
      %v121 = vrot.slane %v120, 2
      %v122 = vadd.f32 %v120, %v121
      %v123 = vrot.slane %v122, 1
      %v124 = vadd.f32 %v122, %v123
      %s125 = vtos %v124
      %s126 = scalar_lea.smem [#allocation9], 0
      %127 = sst [smem:[%s126]] %s125
    $region33: #{tpu_custom_call.1} parent=1 // pred_fallthru
      _
    // Predicated region
    $region34: #{tpu_custom_call.1} parent=1 // pred_check
      _
    $region35: #{tpu_custom_call.1} parent=1 // pred_check_branch
      %129 = sbr.rel (0) target = $region37
    $region36: #{tpu_custom_call.1} parent=1 // pred_region
      %s131 = ssub.s32 16, 16
      %132 = vsyncadd [#allocation5], %s131
      %135 = dma.smem_to_hbm [#allocation9], 16, %s3, [#allocation5]
    $region37: #{tpu_custom_call.1} parent=1 // pred_fallthru
      _
    // Predicated region
    $region38: #{tpu_custom_call.1} parent=1 // pred_check
      _
    $region39: #{tpu_custom_call.1} parent=1 // pred_check_branch
      %137 = sbr.rel (0) target = $region41
    $region40: #{tpu_custom_call.1} parent=1 // pred_region
      %138 = dma.done [#allocation5], 16
    $region41: #{tpu_custom_call.1} parent=1 // pred_fallthru
      _
    %139 = sfence
    %140 = vsyncpa [#allocation4], 1
    %141 = vsyncpa [#allocation7], 1
    %142 = vsyncpa [#allocation5], 1

</llo_original>
